<compile_context>
chip_gen: v7x
topology: tpu7x:2x2x1
jax: 0.10.0
libtpu: 0.0.40
codegen_flags: <defaults>
</compile_context>

<pallas_src>
import functools

import numpy as np
import jax
import jax.numpy as jnp
from jax.experimental import pallas as pl
from jax.experimental.pallas import tpu as pltpu

NEG_SLOPE = 0.01  # F.leaky_relu default


def _leaky_relu(v):
    return jnp.where(v >= 0, v, v * NEG_SLOPE)


def discriminator_kernel(x_ref, w48_ref, wstk_ref, bias_ref, out_ref, *, nn3, dim):
    """Fused forward for one batch tile.

    x_ref    : (Bt, 3*J)           bf16 input poses
    w48_ref  : (3*J, 2*nn3 + dim)  bf16 [ M_rep | M_tile | w1 ]  (lane offsets 0, nn3, 2*nn3)
    wstk_ref : (NN + 6*dim, dim)   bf16 rows: [ kw1 ; w2 ; w3 ; w4 ; kw2 ; hw_top ; hw_bot ]
    bias_ref : (9, dim)            f32 rows: [ b1 ; b2 ; b3 ; b4 ; kb1 ; kb2 ; hb ; pw ; pb@[8,0] ]
    out_ref  : (Bt, 1)             f32 sigmoid output
    """
    NN = nn3 // 3

    # One lane-dense bf16 matmul produces the KCS rep/tile expansions AND the l1 pre-activation.
    z = jnp.dot(x_ref[...], w48_ref[...], preferred_element_type=jnp.float32)  # (Bt, 2*nn3+dim) f32
    rep = z[:, :nn3]                       # rep[b, k*NN + i*N + j] = B_k[b, i]
    til = z[:, nn3:2 * nn3]                # til[b, k*NN + i*N + j] = B_k[b, j]
    l1_pre = z[:, 2 * nn3:2 * nn3 + dim]   # x @ w1

    # Biases + predict weight: one (9, dim) f32 tile, static sublane slices.
    b = bias_ref[...]
    b1, b2, b3, b4, kb1, kb2, hb, pw_row = (b[i:i + 1, :] for i in range(8))
    pb = b[8:9, 0:1]

    # Stacked bf16 weight slab: static row slices (all offsets multiples of 16/32 sublanes).
    w_kw1 = wstk_ref[0:NN, :]
    r0 = NN
    w2  = wstk_ref[r0:r0 + dim, :]
    w3  = wstk_ref[r0 + dim:r0 + 2 * dim, :]
    w4  = wstk_ref[r0 + 2 * dim:r0 + 3 * dim, :]
    kw2 = wstk_ref[r0 + 3 * dim:r0 + 4 * dim, :]
    hwa = wstk_ref[r0 + 4 * dim:r0 + 5 * dim, :]
    hwb = wstk_ref[r0 + 5 * dim:r0 + 6 * dim, :]

    # bf16 x bf16 MXU dots with f32 accumulation (single MXU pass per dot).
    dot = lambda a, w: jnp.dot(a.astype(jnp.bfloat16), w, preferred_element_type=jnp.float32)

    # ---------------- pose path ----------------
    l1 = _leaky_relu(l1_pre + b1)
    l2 = _leaky_relu(dot(l1, w2) + b2)
    l3 = _leaky_relu(dot(l2, w3) + b3)
    skip = _leaky_relu(l1 + l3)
    l4 = dot(skip, w4) + b4

    # ---------------- KCS path ----------------
    # prod[b, k*NN + i*N + j] = B_k[b,i] * B_k[b,j]; k-sum on the VPU (128-aligned slices),
    # then a single (Bt, NN) @ (NN, dim) contraction with the untiled kcs_l1 weight.
    prod = rep * til
    psi_vec = prod[:, :NN] + prod[:, NN:2 * NN] + prod[:, 2 * NN:3 * NN]   # (Bt, NN)
    k1 = _leaky_relu(dot(psi_vec, w_kw1) + kb1)
    k2 = _leaky_relu(dot(k1, kw2) + kb2)
    # reference forward applies kcs_l2 again here (kcs_l3 params are never used)
    k3 = _leaky_relu(dot(k2, kw2) + kb2)
    kcs_skip = k1 + k3

    # ---------------- hidden + predict ----------------
    # concat([l4, kcs_skip]) @ hidden_W  ==  l4 @ hw_top + kcs_skip @ hw_bot
    hidden = _leaky_relu(dot(l4, hwa) + dot(kcs_skip, hwb) + hb)
    # predict layer as a VPU multiply + 32-lane XLU reduction (no padded MXU op).
    logits = jnp.sum(hidden * pw_row, axis=-1, keepdims=True) + pb
    out_ref[...] = jax.nn.sigmoid(logits).astype(out_ref.dtype)


def pack_params(params, kcs_np, weight_dtype=jnp.bfloat16):
    """Pack all parameters + KCS expansion matrices into 3 lane/sublane-friendly arrays."""
    J, N = kcs_np.shape
    NN = N * N
    nn3 = 3 * NN
    dim = params["b1"].shape[0]

    # In-kernel lane slices sit at offsets {0, NN, 2*NN, nn3, 2*nn3} -> keep them 128-aligned.
    assert NN % 128 == 0, "KCS Psi width must be a multiple of 128 (pad connections if needed)"

    # ---- W48: x-side slab (3J, 2*nn3 + dim) = [ M_rep | M_tile | w1 ] ----
    rep_blk = np.repeat(kcs_np, N, axis=1).astype(np.float32)   # column i*N+j -> C[:, i]
    tile_blk = np.tile(kcs_np, (1, N)).astype(np.float32)       # column i*N+j -> C[:, j]
    w48_np = np.zeros((3 * J, 2 * nn3 + dim), np.float32)
    for k in range(3):
        w48_np[k * J:(k + 1) * J, k * NN:(k + 1) * NN] = rep_blk
        w48_np[k * J:(k + 1) * J, nn3 + k * NN:nn3 + (k + 1) * NN] = tile_blk
    w48 = jnp.asarray(w48_np).at[:, 2 * nn3:].set(params["w1"]).astype(weight_dtype)

    # ---- Wstack: every dim-in weight stacked along rows (sublane-aligned offsets) ----
    wstk = jnp.concatenate(
        [params["kw1"], params["w2"], params["w3"], params["w4"],
         params["kw2"], params["hw"][:dim], params["hw"][dim:]], axis=0).astype(weight_dtype)

    # ---- biases + predict weight/bias: one (9, dim) f32 tile ----
    bias = jnp.concatenate(
        [jnp.stack([params["b1"], params["b2"], params["b3"], params["b4"],
                    params["kb1"], params["kb2"], params["hb"],
                    params["pw"][:, 0]], axis=0),
         jnp.zeros((1, dim), jnp.float32).at[0, 0].set(params["pb"][0])], axis=0)

    return (w48, wstk, bias), nn3, dim


def discriminator_forward(x, packed, nn3, dim, *, block_b=None,
                          vmem_limit_bytes=32 * 1024 * 1024):
    w48, wstk, bias = packed
    B = x.shape[0]
    xb = x.astype(w48.dtype)                      # bf16 input halves the x DMA
    kernel = functools.partial(discriminator_kernel, nn3=nn3, dim=dim)
    out_shape = jax.ShapeDtypeStruct((B, 1), jnp.float32)

    # Cost hint so XLA can overlap this few-microsecond kernel with surrounding HLO.
    flops = 2 * B * (x.shape[1] * w48.shape[1] + (nn3 // 3) * dim + 7 * dim * dim + dim)
    bytes_accessed = int(xb.size * xb.dtype.itemsize + w48.size * w48.dtype.itemsize
                         + wstk.size * wstk.dtype.itemsize + bias.size * bias.dtype.itemsize
                         + B * 4)
    cost = pl.CostEstimate(flops=flops, transcendentals=B, bytes_accessed=bytes_accessed)

    if block_b is None or block_b >= B:
        # Single-shot: no grid / pipeline machinery, 4 DMAs, everything resident in VMEM.
        # Intermediates (z / prod / psi) cost ~15-25 KB f32 per batch row; switch to the
        # tiled path for B beyond roughly ~700 (v5e, 16 MiB scoped) / ~1400 (v6e/v7x).
        return pl.pallas_call(
            kernel,
            out_shape=out_shape,
            compiler_params=pltpu.CompilerParams(vmem_limit_bytes=vmem_limit_bytes),
            cost_estimate=cost,
        )(xb, w48, wstk, bias)

    # Batch-tiled path: parallel grid over batch rows (shards across TensorCores on v7x);
    # weight blocks are grid-invariant so they stay VMEM-resident.  Pick block_b as a
    # multiple of 256 (fills the 256-deep MXU M on v6e/v7x) and so that each core gets
    # >= 2 grid steps; cap ~512 on v5e (16 MiB scoped VMEM).
    assert B % block_b == 0 and block_b % 16 == 0
    return pl.pallas_call(
        kernel,
        out_shape=out_shape,
        grid=(B // block_b,),
        in_specs=[
            pl.BlockSpec((block_b, x.shape[1]), lambda i: (i, 0)),
            pl.BlockSpec(w48.shape, lambda i: (0, 0)),
            pl.BlockSpec(wstk.shape, lambda i: (0, 0)),
            pl.BlockSpec(bias.shape, lambda i: (0, 0)),
        ],
        out_specs=pl.BlockSpec((block_b, 1), lambda i: (i, 0)),
        compiler_params=pltpu.CompilerParams(
            dimension_semantics=("parallel",),
            vmem_limit_bytes=vmem_limit_bytes),
        cost_estimate=cost,
    )(xb, w48, wstk, bias)


def reference_forward(x, params, kcs_matrix):
    """Pure-JAX f32 transcription of the PyTorch forward (for verification)."""
    lr = lambda v: jnp.where(v >= 0, v, NEG_SLOPE * v)
    l1 = lr(x @ params["w1"] + params["b1"])
    l2 = lr(l1 @ params["w2"] + params["b2"])
    l3 = lr(l2 @ params["w3"] + params["b3"])
    skip = lr(l1 + l3)
    l4 = skip @ params["w4"] + params["b4"]
    J, N = kcs_matrix.shape
    poses3 = x.reshape(-1, 3, J)
    Bm = jnp.einsum("bkj,jn->bkn", poses3, kcs_matrix)
    psi = jnp.einsum("bki,bkj->bij", Bm, Bm)
    psi_vec = psi.reshape(x.shape[0], N * N)
    k1 = lr(psi_vec @ params["kw1"] + params["kb1"])
    k2 = lr(k1 @ params["kw2"] + params["kb2"])
    k3 = lr(k2 @ params["kw2"] + params["kb2"])    # same kcs_l2 reuse as the module
    kcs_skip = k1 + k3
    h = lr(jnp.concatenate([l4, kcs_skip], axis=1) @ params["hw"] + params["hb"])
    return jax.nn.sigmoid(h @ params["pw"] + params["pb"])


if __name__ == "__main__":
    # ---- small, module-consistent shapes ----
    batch = 8
    num_joints = 16                       # input_size / 3
    input_size = 3 * num_joints           # 48
    linear_dim = 32
    connections = [[i, i + 1] for i in range(num_joints - 1)] + [[num_joints - 1, 0]]
    n_conn = len(connections)             # 16
    psi_shape = n_conn * n_conn           # 256

    # kcs_matrix exactly as in __init__
    kcs_np = np.zeros((num_joints, n_conn), dtype=np.float32)
    for idx, c in enumerate(connections):
        kcs_np[c[0], idx] = 1.0
        kcs_np[c[1], idx] = -1.0
    kcs_matrix = jnp.asarray(kcs_np)

    # ---- deterministic synthetic parameters (weights stored as (in, out)) ----
    key = jax.random.PRNGKey(0)
    keys = jax.random.split(key, 24)

    def init_linear(kw, kb, fan_in, fan_out, scale=0.05):
        w = scale * jax.random.normal(kw, (fan_in, fan_out), dtype=jnp.float32)
        b = scale * jax.random.normal(kb, (fan_out,), dtype=jnp.float32)
        return w, b

    params = {}
    params["w1"], params["b1"] = init_linear(keys[0], keys[1], input_size, linear_dim)
    params["w2"], params["b2"] = init_linear(keys[2], keys[3], linear_dim, linear_dim)
    params["w3"], params["b3"] = init_linear(keys[4], keys[5], linear_dim, linear_dim)
    params["w4"], params["b4"] = init_linear(keys[6], keys[7], linear_dim, linear_dim)
    params["kw1"], params["kb1"] = init_linear(keys[8], keys[9], psi_shape, linear_dim)
    params["kw2"], params["kb2"] = init_linear(keys[10], keys[11], linear_dim, linear_dim)
    # kcs_l3 params exist in __init__ but are unused by forward (module reuses kcs_l2).
    params["kw3"], params["kb3"] = init_linear(keys[12], keys[13], linear_dim, linear_dim)
    params["hw"], params["hb"] = init_linear(keys[14], keys[15], 2 * linear_dim, linear_dim)
    params["pw"], params["pb"] = init_linear(keys[16], keys[17], linear_dim, 1)

    packed, nn3, dim = pack_params(params, kcs_np)

    # bf16 inputs/weights with f32 accumulation -> relax tolerance accordingly.
    RTOL, ATOL = 1e-2, 2e-3

    # ---- small single-shot run (no grid) ----
    x = 0.5 * jax.random.normal(keys[18], (batch, input_size), dtype=jnp.float32)
    out = jax.block_until_ready(discriminator_forward(x, packed, nn3, dim))
    with jax.default_matmul_precision("float32"):
        ref = jax.block_until_ready(reference_forward(x, params, kcs_matrix))
    assert out.shape == (batch, 1), out.shape
    assert bool(jnp.all(jnp.isfinite(out)))
    np.testing.assert_allclose(np.asarray(out), np.asarray(ref), rtol=RTOL, atol=ATOL)

    # ---- larger batch, tiled over a parallel grid axis ----
    # block_b=512 is a multiple of 256 (fills the v6e/v7x MXU M), grid=(4,) gives each v7x
    # TensorCore >= 2 steps, and the per-tile VMEM footprint stays far under the 16 MiB
    # v5e scoped limit (vmem_limit_bytes is set explicitly anyway).
    big_batch = 2048
    xb = 0.5 * jax.random.normal(keys[19], (big_batch, input_size), dtype=jnp.float32)
    out_b = jax.block_until_ready(discriminator_forward(xb, packed, nn3, dim, block_b=512))
    with jax.default_matmul_precision("float32"):
        ref_b = jax.block_until_ready(reference_forward(xb, params, kcs_matrix))
    assert out_b.shape == (big_batch, 1)
    np.testing.assert_allclose(np.asarray(out_b), np.asarray(ref_b), rtol=RTOL, atol=ATOL)

    print("KERNEL_OK")
</pallas_src>

<mosaic_0001>
module attributes {stable_mosaic.version = 11 : i64} {
  func.func @discriminator_kernel(%arg0: memref<8x48xbf16, #tpu.memory_space<vmem>>, %arg1: memref<48x1568xbf16, #tpu.memory_space<vmem>>, %arg2: memref<448x32xbf16, #tpu.memory_space<vmem>>, %arg3: memref<9x32xf32, #tpu.memory_space<vmem>>, %arg4: memref<8x1xf32, #tpu.memory_space<vmem>>) attributes {dimension_semantics = [], scalar_prefetch = 0 : i64, scratch_operands = 0 : i64, tpu.core_type = #tpu.core_type<tc>} {
    %c0 = arith.constant 0 : index
    %c0_0 = arith.constant 0 : index
    %0 = vector.load %arg0[%c0, %c0_0] : memref<8x48xbf16, #tpu.memory_space<vmem>>, vector<8x48xbf16>
    %c0_1 = arith.constant 0 : index
    %c0_2 = arith.constant 0 : index
    %1 = vector.load %arg1[%c0_1, %c0_2] : memref<48x1568xbf16, #tpu.memory_space<vmem>>, vector<48x1568xbf16>
    %cst = arith.constant dense<0.000000e+00> : vector<8x1568xf32>
    %2 = tpu.matmul %0, %1, %cst {dimension_numbers = #tpu.dot_dimension_numbers<[1], [0], [0], [1], [0, 0, 1, 1], [], []>} : vector<8x48xbf16>, vector<48x1568xbf16>, vector<8x1568xf32> -> vector<8x1568xf32>
    %3 = vector.extract_strided_slice %2 {offsets = [0, 0], sizes = [8, 768], strides = [1, 1]} : vector<8x1568xf32> to vector<8x768xf32>
    %4 = vector.extract_strided_slice %2 {offsets = [0, 768], sizes = [8, 768], strides = [1, 1]} : vector<8x1568xf32> to vector<8x768xf32>
    %5 = vector.extract_strided_slice %2 {offsets = [0, 1536], sizes = [8, 32], strides = [1, 1]} : vector<8x1568xf32> to vector<8x32xf32>
    %c0_3 = arith.constant 0 : index
    %c0_4 = arith.constant 0 : index
    %6 = vector.load %arg3[%c0_3, %c0_4] : memref<9x32xf32, #tpu.memory_space<vmem>>, vector<9x32xf32>
    %7 = vector.extract_strided_slice %6 {offsets = [0, 0], sizes = [1, 32], strides = [1, 1]} : vector<9x32xf32> to vector<1x32xf32>
    %8 = vector.extract_strided_slice %6 {offsets = [1, 0], sizes = [1, 32], strides = [1, 1]} : vector<9x32xf32> to vector<1x32xf32>
    %9 = vector.extract_strided_slice %6 {offsets = [2, 0], sizes = [1, 32], strides = [1, 1]} : vector<9x32xf32> to vector<1x32xf32>
    %10 = vector.extract_strided_slice %6 {offsets = [3, 0], sizes = [1, 32], strides = [1, 1]} : vector<9x32xf32> to vector<1x32xf32>
    %11 = vector.extract_strided_slice %6 {offsets = [4, 0], sizes = [1, 32], strides = [1, 1]} : vector<9x32xf32> to vector<1x32xf32>
    %12 = vector.extract_strided_slice %6 {offsets = [5, 0], sizes = [1, 32], strides = [1, 1]} : vector<9x32xf32> to vector<1x32xf32>
    %13 = vector.extract_strided_slice %6 {offsets = [6, 0], sizes = [1, 32], strides = [1, 1]} : vector<9x32xf32> to vector<1x32xf32>
    %14 = vector.extract_strided_slice %6 {offsets = [7, 0], sizes = [1, 32], strides = [1, 1]} : vector<9x32xf32> to vector<1x32xf32>
    %15 = vector.extract_strided_slice %6 {offsets = [8, 0], sizes = [1, 1], strides = [1, 1]} : vector<9x32xf32> to vector<1x1xf32>
    %c0_5 = arith.constant 0 : index
    %c0_6 = arith.constant 0 : index
    %16 = vector.load %arg2[%c0_5, %c0_6] : memref<448x32xbf16, #tpu.memory_space<vmem>>, vector<256x32xbf16>
    %c256 = arith.constant 256 : index
    %c0_7 = arith.constant 0 : index
    %17 = vector.load %arg2[%c256, %c0_7] : memref<448x32xbf16, #tpu.memory_space<vmem>>, vector<32x32xbf16>
    %c288 = arith.constant 288 : index
    %c0_8 = arith.constant 0 : index
    %18 = vector.load %arg2[%c288, %c0_8] : memref<448x32xbf16, #tpu.memory_space<vmem>>, vector<32x32xbf16>
    %c320 = arith.constant 320 : index
    %c0_9 = arith.constant 0 : index
    %19 = vector.load %arg2[%c320, %c0_9] : memref<448x32xbf16, #tpu.memory_space<vmem>>, vector<32x32xbf16>
    %c352 = arith.constant 352 : index
    %c0_10 = arith.constant 0 : index
    %20 = vector.load %arg2[%c352, %c0_10] : memref<448x32xbf16, #tpu.memory_space<vmem>>, vector<32x32xbf16>
    %c384 = arith.constant 384 : index
    %c0_11 = arith.constant 0 : index
    %21 = vector.load %arg2[%c384, %c0_11] : memref<448x32xbf16, #tpu.memory_space<vmem>>, vector<32x32xbf16>
    %c416 = arith.constant 416 : index
    %c0_12 = arith.constant 0 : index
    %22 = vector.load %arg2[%c416, %c0_12] : memref<448x32xbf16, #tpu.memory_space<vmem>>, vector<32x32xbf16>
    %23 = vector.broadcast %7 : vector<1x32xf32> to vector<8x32xf32>
    %24 = arith.addf %5, %23 : vector<8x32xf32>
    %cst_13 = arith.constant 0.000000e+00 : f32
    %25 = vector.broadcast %cst_13 : f32 to vector<8x32xf32>
    %26 = arith.cmpf oge, %24, %25 : vector<8x32xf32>
    %cst_14 = arith.constant 0.00999999977 : f32
    %27 = vector.broadcast %cst_14 : f32 to vector<8x32xf32>
    %28 = arith.mulf %24, %27 : vector<8x32xf32>
    %29 = arith.select %26, %24, %28 : vector<8x32xi1>, vector<8x32xf32>
    %30 = arith.truncf %29 : vector<8x32xf32> to vector<8x32xbf16>
    %cst_15 = arith.constant dense<0.000000e+00> : vector<8x32xf32>
    %31 = tpu.matmul %30, %17, %cst_15 {dimension_numbers = #tpu.dot_dimension_numbers<[1], [0], [0], [1], [0, 0, 1, 1], [], []>} : vector<8x32xbf16>, vector<32x32xbf16>, vector<8x32xf32> -> vector<8x32xf32>
    %32 = vector.broadcast %8 : vector<1x32xf32> to vector<8x32xf32>
    %33 = arith.addf %31, %32 : vector<8x32xf32>
    %cst_16 = arith.constant 0.000000e+00 : f32
    %34 = vector.broadcast %cst_16 : f32 to vector<8x32xf32>
    %35 = arith.cmpf oge, %33, %34 : vector<8x32xf32>
    %cst_17 = arith.constant 0.00999999977 : f32
    %36 = vector.broadcast %cst_17 : f32 to vector<8x32xf32>
    %37 = arith.mulf %33, %36 : vector<8x32xf32>
    %38 = arith.select %35, %33, %37 : vector<8x32xi1>, vector<8x32xf32>
    %39 = arith.truncf %38 : vector<8x32xf32> to vector<8x32xbf16>
    %cst_18 = arith.constant dense<0.000000e+00> : vector<8x32xf32>
    %40 = tpu.matmul %39, %18, %cst_18 {dimension_numbers = #tpu.dot_dimension_numbers<[1], [0], [0], [1], [0, 0, 1, 1], [], []>} : vector<8x32xbf16>, vector<32x32xbf16>, vector<8x32xf32> -> vector<8x32xf32>
    %41 = vector.broadcast %9 : vector<1x32xf32> to vector<8x32xf32>
    %42 = arith.addf %40, %41 : vector<8x32xf32>
    %cst_19 = arith.constant 0.000000e+00 : f32
    %43 = vector.broadcast %cst_19 : f32 to vector<8x32xf32>
    %44 = arith.cmpf oge, %42, %43 : vector<8x32xf32>
    %cst_20 = arith.constant 0.00999999977 : f32
    %45 = vector.broadcast %cst_20 : f32 to vector<8x32xf32>
    %46 = arith.mulf %42, %45 : vector<8x32xf32>
    %47 = arith.select %44, %42, %46 : vector<8x32xi1>, vector<8x32xf32>
    %48 = arith.addf %29, %47 : vector<8x32xf32>
    %cst_21 = arith.constant 0.000000e+00 : f32
    %49 = vector.broadcast %cst_21 : f32 to vector<8x32xf32>
    %50 = arith.cmpf oge, %48, %49 : vector<8x32xf32>
    %cst_22 = arith.constant 0.00999999977 : f32
    %51 = vector.broadcast %cst_22 : f32 to vector<8x32xf32>
    %52 = arith.mulf %48, %51 : vector<8x32xf32>
    %53 = arith.select %50, %48, %52 : vector<8x32xi1>, vector<8x32xf32>
    %54 = arith.truncf %53 : vector<8x32xf32> to vector<8x32xbf16>
    %cst_23 = arith.constant dense<0.000000e+00> : vector<8x32xf32>
    %55 = tpu.matmul %54, %19, %cst_23 {dimension_numbers = #tpu.dot_dimension_numbers<[1], [0], [0], [1], [0, 0, 1, 1], [], []>} : vector<8x32xbf16>, vector<32x32xbf16>, vector<8x32xf32> -> vector<8x32xf32>
    %56 = vector.broadcast %10 : vector<1x32xf32> to vector<8x32xf32>
    %57 = arith.addf %55, %56 : vector<8x32xf32>
    %58 = arith.mulf %3, %4 : vector<8x768xf32>
    %59 = vector.extract_strided_slice %58 {offsets = [0, 0], sizes = [8, 256], strides = [1, 1]} : vector<8x768xf32> to vector<8x256xf32>
    %60 = vector.extract_strided_slice %58 {offsets = [0, 256], sizes = [8, 256], strides = [1, 1]} : vector<8x768xf32> to vector<8x256xf32>
    %61 = arith.addf %59, %60 : vector<8x256xf32>
    %62 = vector.extract_strided_slice %58 {offsets = [0, 512], sizes = [8, 256], strides = [1, 1]} : vector<8x768xf32> to vector<8x256xf32>
    %63 = arith.addf %61, %62 : vector<8x256xf32>
    %64 = arith.truncf %63 : vector<8x256xf32> to vector<8x256xbf16>
    %cst_24 = arith.constant dense<0.000000e+00> : vector<8x32xf32>
    %65 = tpu.matmul %64, %16, %cst_24 {dimension_numbers = #tpu.dot_dimension_numbers<[1], [0], [0], [1], [0, 0, 1, 1], [], []>} : vector<8x256xbf16>, vector<256x32xbf16>, vector<8x32xf32> -> vector<8x32xf32>
    %66 = vector.broadcast %11 : vector<1x32xf32> to vector<8x32xf32>
    %67 = arith.addf %65, %66 : vector<8x32xf32>
    %cst_25 = arith.constant 0.000000e+00 : f32
    %68 = vector.broadcast %cst_25 : f32 to vector<8x32xf32>
    %69 = arith.cmpf oge, %67, %68 : vector<8x32xf32>
    %cst_26 = arith.constant 0.00999999977 : f32
    %70 = vector.broadcast %cst_26 : f32 to vector<8x32xf32>
    %71 = arith.mulf %67, %70 : vector<8x32xf32>
    %72 = arith.select %69, %67, %71 : vector<8x32xi1>, vector<8x32xf32>
    %73 = arith.truncf %72 : vector<8x32xf32> to vector<8x32xbf16>
    %cst_27 = arith.constant dense<0.000000e+00> : vector<8x32xf32>
    %74 = tpu.matmul %73, %20, %cst_27 {dimension_numbers = #tpu.dot_dimension_numbers<[1], [0], [0], [1], [0, 0, 1, 1], [], []>} : vector<8x32xbf16>, vector<32x32xbf16>, vector<8x32xf32> -> vector<8x32xf32>
    %75 = vector.broadcast %12 : vector<1x32xf32> to vector<8x32xf32>
    %76 = arith.addf %74, %75 : vector<8x32xf32>
    %cst_28 = arith.constant 0.000000e+00 : f32
    %77 = vector.broadcast %cst_28 : f32 to vector<8x32xf32>
    %78 = arith.cmpf oge, %76, %77 : vector<8x32xf32>
    %cst_29 = arith.constant 0.00999999977 : f32
    %79 = vector.broadcast %cst_29 : f32 to vector<8x32xf32>
    %80 = arith.mulf %76, %79 : vector<8x32xf32>
    %81 = arith.select %78, %76, %80 : vector<8x32xi1>, vector<8x32xf32>
    %82 = arith.truncf %81 : vector<8x32xf32> to vector<8x32xbf16>
    %cst_30 = arith.constant dense<0.000000e+00> : vector<8x32xf32>
    %83 = tpu.matmul %82, %20, %cst_30 {dimension_numbers = #tpu.dot_dimension_numbers<[1], [0], [0], [1], [0, 0, 1, 1], [], []>} : vector<8x32xbf16>, vector<32x32xbf16>, vector<8x32xf32> -> vector<8x32xf32>
    %84 = vector.broadcast %12 : vector<1x32xf32> to vector<8x32xf32>
    %85 = arith.addf %83, %84 : vector<8x32xf32>
    %cst_31 = arith.constant 0.000000e+00 : f32
    %86 = vector.broadcast %cst_31 : f32 to vector<8x32xf32>
    %87 = arith.cmpf oge, %85, %86 : vector<8x32xf32>
    %cst_32 = arith.constant 0.00999999977 : f32
    %88 = vector.broadcast %cst_32 : f32 to vector<8x32xf32>
    %89 = arith.mulf %85, %88 : vector<8x32xf32>
    %90 = arith.select %87, %85, %89 : vector<8x32xi1>, vector<8x32xf32>
    %91 = arith.addf %72, %90 : vector<8x32xf32>
    %92 = arith.truncf %57 : vector<8x32xf32> to vector<8x32xbf16>
    %cst_33 = arith.constant dense<0.000000e+00> : vector<8x32xf32>
    %93 = tpu.matmul %92, %21, %cst_33 {dimension_numbers = #tpu.dot_dimension_numbers<[1], [0], [0], [1], [0, 0, 1, 1], [], []>} : vector<8x32xbf16>, vector<32x32xbf16>, vector<8x32xf32> -> vector<8x32xf32>
    %94 = arith.truncf %91 : vector<8x32xf32> to vector<8x32xbf16>
    %cst_34 = arith.constant dense<0.000000e+00> : vector<8x32xf32>
    %95 = tpu.matmul %94, %22, %cst_34 {dimension_numbers = #tpu.dot_dimension_numbers<[1], [0], [0], [1], [0, 0, 1, 1], [], []>} : vector<8x32xbf16>, vector<32x32xbf16>, vector<8x32xf32> -> vector<8x32xf32>
    %96 = arith.addf %93, %95 : vector<8x32xf32>
    %97 = vector.broadcast %13 : vector<1x32xf32> to vector<8x32xf32>
    %98 = arith.addf %96, %97 : vector<8x32xf32>
    %cst_35 = arith.constant 0.000000e+00 : f32
    %99 = vector.broadcast %cst_35 : f32 to vector<8x32xf32>
    %100 = arith.cmpf oge, %98, %99 : vector<8x32xf32>
    %cst_36 = arith.constant 0.00999999977 : f32
    %101 = vector.broadcast %cst_36 : f32 to vector<8x32xf32>
    %102 = arith.mulf %98, %101 : vector<8x32xf32>
    %103 = arith.select %100, %98, %102 : vector<8x32xi1>, vector<8x32xf32>
    %104 = vector.broadcast %14 : vector<1x32xf32> to vector<8x32xf32>
    %105 = arith.mulf %103, %104 : vector<8x32xf32>
    %cst_37 = arith.constant dense<0.000000e+00> : vector<8xf32>
    %106 = vector.multi_reduction <add>, %105, %cst_37 [1] : vector<8x32xf32> to vector<8xf32>
    %107 = vector.shape_cast %106 : vector<8xf32> to vector<8x1xf32>
    %108 = vector.broadcast %15 : vector<1x1xf32> to vector<8x1xf32>
    %109 = arith.addf %107, %108 : vector<8x1xf32>
    %110 = arith.negf %109 : vector<8x1xf32>
    %111 = math.exp %110 : vector<8x1xf32>
    %cst_38 = arith.constant 1.000000e+00 : f32
    %112 = vector.broadcast %cst_38 : f32 to vector<8x1xf32>
    %113 = arith.addf %112, %111 : vector<8x1xf32>
    %114 = arith.divf %112, %113 : vector<8x1xf32>
    %c0_39 = arith.constant 0 : index
    %c0_40 = arith.constant 0 : index
    %115 = vector.load %arg4[%c0_39, %c0_40] : memref<8x1xf32, #tpu.memory_space<vmem>>, vector<8x1xf32>
    tpu.vector_store %arg4[%c0_39, %c0_40], %114 {strides = array<i32>} : memref<8x1xf32, #tpu.memory_space<vmem>>, vector<8x1xf32>,
    return
  }
}

</mosaic_0001>

<llo_original>
// kernel: tpu_custom_call.1
$region0: #{tpu_custom_call.1}
  #allocation0 [shape = 'u32[]', space=smem, size = 0x4, offset = 0x4, fixed_abs, tag = 'smem constant byte address 0x4 - core index']
  #allocation1 [shape = 'u32[144,128]{1,0:T(1,128)}', space=vmem, size = 0x12000, scoped, tag = 'internal scratch']
  %s0 = inlined_call_operand.vmem [shape: bf16[8,48], index: 0, kind: input, shape index: {}]
  %s1 = inlined_call_operand.hbm [shape: bf16[48,1568], index: 1, kind: input, shape index: {}]
  %s2 = inlined_call_operand.vmem [shape: bf16[448,32], index: 2, kind: input, shape index: {}]
  %s3 = inlined_call_operand.vmem [shape: f32[9,32], index: 3, kind: input, shape index: {}]
  %s4 = inlined_call_operand.vmem [shape: f32[8,1], index: 4, kind: output, shape index: {}]
  %s5 = sld [smem:[#allocation0]]
  $region30: #{tpu_custom_call.1} parent=0
    _
  %s7 = ssub.s32 1, %s5
  %s8 = scalar_select 0, %s7, %s5
  $region1: #{tpu_custom_call.1} parent=0
    #allocation2 [shape = 'u8[159744]{0}', space=vmem, size = 0x27000, scoped, tag = 'input window, operand 1, single buffered']
    #allocation3 [shape = 's32[1]{0}', space=sflag, size = 0x4, scoped, tag = 'scoped memory for tpu_custom_call.1']
    %9 = vsyncpa [#allocation3], 0
    // Predicated region
    $region2: #{tpu_custom_call.1} parent=1 // pred_check
      _
    $region3: #{tpu_custom_call.1} parent=1 // pred_check_branch
      %11 = sbr.rel (0) target = $region5
    $region4: #{tpu_custom_call.1} parent=1 // pred_region
      _
    $region5: #{tpu_custom_call.1} parent=1 // pred_fallthru
      _
    // Predicated region
    $region6: #{tpu_custom_call.1} parent=1 // pred_check
      _
    $region7: #{tpu_custom_call.1} parent=1 // pred_check_branch
      %13 = sbr.rel (0) target = $region9
    $region8: #{tpu_custom_call.1} parent=1 // pred_region
      %s15 = ssub.s32 4992, 4992
      %16 = vsyncadd [#allocation3], %s15
      %s17 = sshll.u32 [#allocation2], 4
      %s18 = int_to_ptr.vmem [resolvable:$true] %s17
      %23 = dma.hbm_to_vmem [thread:$0]  %s1, 4992, %s18, [#allocation3], 832, 832, 52
    $region9: #{tpu_custom_call.1} parent=1 // pred_fallthru
      _
    // Predicated region
    $region10: #{tpu_custom_call.1} parent=1 // pred_check
      _
    $region11: #{tpu_custom_call.1} parent=1 // pred_check_branch
      %25 = sbr.rel (0) target = $region13
    $region12: #{tpu_custom_call.1} parent=1 // pred_region
      _
    $region13: #{tpu_custom_call.1} parent=1 // pred_fallthru
      _
    // Predicated region
    $region14: #{tpu_custom_call.1} parent=1 // pred_check
      _
    $region15: #{tpu_custom_call.1} parent=1 // pred_check_branch
      %27 = sbr.rel (0) target = $region17
    $region16: #{tpu_custom_call.1} parent=1 // pred_region
      _
    $region17: #{tpu_custom_call.1} parent=1 // pred_fallthru
      _
    // Predicated region
    $region18: #{tpu_custom_call.1} parent=1 // pred_check
      _
    $region19: #{tpu_custom_call.1} parent=1 // pred_check_branch
      %29 = sbr.rel (0) target = $region21
    $region20: #{tpu_custom_call.1} parent=1 // pred_region
      %30 = dma.done [#allocation3], 4992
    $region21: #{tpu_custom_call.1} parent=1 // pred_fallthru
      _
    %v32 = vld [vmem:[%s0] sm:$0xf]
    %v33 = vld [vmem:[#allocation2] sm:$0xff]
    %v34 = vld [vmem:[#allocation2 + $0x8] sm:$0xff]
    %v35 = vld [vmem:[#allocation2 + $0x10] sm:$0xff]
    %v36 = vld [vmem:[#allocation2 + $0x18] sm:$0xff]
    %v37 = vld [vmem:[#allocation2 + $0x20] sm:$0xff]
    %v38 = vld [vmem:[#allocation2 + $0x28] sm:$0xff]
    %v39 = vld [vmem:[#allocation2 + $0x30] sm:$0xf]
    %v40 = vld [vmem:[#allocation2 + $0x34] sm:$0xff]
    %v41 = vld [vmem:[#allocation2 + $0x3c] sm:$0xff]
    %v42 = vld [vmem:[#allocation2 + $0x44] sm:$0xff]
    %v43 = vld [vmem:[#allocation2 + $0x4c] sm:$0xff]
    %v44 = vld [vmem:[#allocation2 + $0x54] sm:$0xff]
    %v45 = vld [vmem:[#allocation2 + $0x5c] sm:$0xff]
    %v46 = vld [vmem:[#allocation2 + $0x64] sm:$0xf]
    %v47 = vld [vmem:[#allocation2 + $0x68] sm:$0xff]
    %v48 = vld [vmem:[#allocation2 + $0x70] sm:$0xff]
    %v49 = vld [vmem:[#allocation2 + $0x78] sm:$0xff]
    %v50 = vld [vmem:[#allocation2 + $0x80] sm:$0xff]
    %v51 = vld [vmem:[#allocation2 + $0x88] sm:$0xff]
    %v52 = vld [vmem:[#allocation2 + $0x90] sm:$0xff]
    %v53 = vld [vmem:[#allocation2 + $0x98] sm:$0xf]
    %v54 = vld [vmem:[#allocation2 + $0x9c] sm:$0xff]
    %v55 = vld [vmem:[#allocation2 + $0xa4] sm:$0xff]
    %v56 = vld [vmem:[#allocation2 + $0xac] sm:$0xff]
    %v57 = vld [vmem:[#allocation2 + $0xb4] sm:$0xff]
    %v58 = vld [vmem:[#allocation2 + $0xbc] sm:$0xff]
    %v59 = vld [vmem:[#allocation2 + $0xc4] sm:$0xff]
    %v60 = vld [vmem:[#allocation2 + $0xcc] sm:$0xf]
    %v61 = vld [vmem:[#allocation2 + $0xd0] sm:$0xff]
    %v62 = vld [vmem:[#allocation2 + $0xd8] sm:$0xff]
    %v63 = vld [vmem:[#allocation2 + $0xe0] sm:$0xff]
    %v64 = vld [vmem:[#allocation2 + $0xe8] sm:$0xff]
    %v65 = vld [vmem:[#allocation2 + $0xf0] sm:$0xff]
    %v66 = vld [vmem:[#allocation2 + $0xf8] sm:$0xff]
    %v67 = vld [vmem:[#allocation2 + $0x100] sm:$0xf]
    %v68 = vld [vmem:[#allocation2 + $0x104] sm:$0xff]
    %v69 = vld [vmem:[#allocation2 + $0x10c] sm:$0xff]
    %v70 = vld [vmem:[#allocation2 + $0x114] sm:$0xff]
    %v71 = vld [vmem:[#allocation2 + $0x11c] sm:$0xff]
    %v72 = vld [vmem:[#allocation2 + $0x124] sm:$0xff]
    %v73 = vld [vmem:[#allocation2 + $0x12c] sm:$0xff]
    %v74 = vld [vmem:[#allocation2 + $0x134] sm:$0xf]
    %v117 = vunpack.c.l.b16 %v33
    %v118 = vunpack.c.h.b16 %v33
    %v119 = vunpack.c.l.b16 %v34
    %v120 = vunpack.c.h.b16 %v34
    %v121 = vunpack.c.l.b16 %v35
    %v122 = vunpack.c.h.b16 %v35
    %v123 = vunpack.c.l.b16 %v36
    %v124 = vunpack.c.h.b16 %v36
    %v125 = vunpack.c.l.b16 %v37
    %v126 = vunpack.c.h.b16 %v37
    %v127 = vunpack.c.l.b16 %v38
    %v128 = vunpack.c.h.b16 %v38
    %v129 = vunpack.c.l.b16 %v39
    %v130 = vunpack.c.l.b16 %v40
    %v131 = vunpack.c.h.b16 %v40
    %v132 = vunpack.c.l.b16 %v41
    %v133 = vunpack.c.h.b16 %v41
    %v134 = vunpack.c.l.b16 %v42
    %v135 = vunpack.c.h.b16 %v42
    %v136 = vunpack.c.l.b16 %v43
    %v137 = vunpack.c.h.b16 %v43
    %v138 = vunpack.c.l.b16 %v44
    %v139 = vunpack.c.h.b16 %v44
    %v140 = vunpack.c.l.b16 %v45
    %v141 = vunpack.c.h.b16 %v45
    %v142 = vunpack.c.l.b16 %v46
    %v143 = vunpack.c.l.b16 %v47
    %v144 = vunpack.c.h.b16 %v47
    %v145 = vunpack.c.l.b16 %v48
    %v146 = vunpack.c.h.b16 %v48
    %v147 = vunpack.c.l.b16 %v49
    %v148 = vunpack.c.h.b16 %v49
    %v149 = vunpack.c.l.b16 %v50
    %v150 = vunpack.c.h.b16 %v50
    %v151 = vunpack.c.l.b16 %v51
    %v152 = vunpack.c.h.b16 %v51
    %v153 = vunpack.c.l.b16 %v52
    %v154 = vunpack.c.h.b16 %v52
    %v155 = vunpack.c.l.b16 %v53
    %v156 = vunpack.c.l.b16 %v54
    %v157 = vunpack.c.h.b16 %v54
    %v158 = vunpack.c.l.b16 %v55
    %v159 = vunpack.c.h.b16 %v55
    %v160 = vunpack.c.l.b16 %v56
    %v161 = vunpack.c.h.b16 %v56
    %v162 = vunpack.c.l.b16 %v57
    %v163 = vunpack.c.h.b16 %v57
    %v164 = vunpack.c.l.b16 %v58
    %v165 = vunpack.c.h.b16 %v58
    %v166 = vunpack.c.l.b16 %v59
    %v167 = vunpack.c.h.b16 %v59
    %v168 = vunpack.c.l.b16 %v60
    %v169 = vunpack.c.l.b16 %v61
    %v170 = vunpack.c.h.b16 %v61
    %v171 = vunpack.c.l.b16 %v62
    %v172 = vunpack.c.h.b16 %v62
    %v173 = vunpack.c.l.b16 %v63
    %v174 = vunpack.c.h.b16 %v63
    %v175 = vunpack.c.l.b16 %v64
    %v176 = vunpack.c.h.b16 %v64
    %v177 = vunpack.c.l.b16 %v65
    %v178 = vunpack.c.h.b16 %v65
    %v179 = vunpack.c.l.b16 %v66
    %v180 = vunpack.c.h.b16 %v66
    %v181 = vunpack.c.l.b16 %v67
    %v182 = vunpack.c.l.b16 %v68
    %v183 = vunpack.c.h.b16 %v68
    %v184 = vunpack.c.l.b16 %v69
    %v185 = vunpack.c.h.b16 %v69
    %v186 = vunpack.c.l.b16 %v70
    %v187 = vunpack.c.h.b16 %v70
    %v188 = vunpack.c.l.b16 %v71
    %v189 = vunpack.c.h.b16 %v71
    %v190 = vunpack.c.l.b16 %v72
    %v191 = vunpack.c.h.b16 %v72
    %v192 = vunpack.c.l.b16 %v73
    %v193 = vunpack.c.h.b16 %v73
    %v194 = vunpack.c.l.b16 %v74
    %v195 = vpack.c.b16 %v130, %v117
    %v196 = vpack.c.b16 %v131, %v118
    %v197 = vpack.c.b16 %v132, %v119
    %v198 = vpack.c.b16 %v133, %v120
    %v199 = vpack.c.b16 %v134, %v121
    %v200 = vpack.c.b16 %v135, %v122
    %v201 = vpack.c.b16 %v136, %v123
    %v202 = vpack.c.b16 %v137, %v124
    %v203 = vpack.c.b16 %v138, %v125
    %v204 = vpack.c.b16 %v139, %v126
    %v205 = vpack.c.b16 %v140, %v127
    %v206 = vpack.c.b16 %v141, %v128
    %v207 = vpack.c.b16 %v142, %v129
    %v208 = vpack.c.b16 %v156, %v143
    %v209 = vpack.c.b16 %v157, %v144
    %v210 = vpack.c.b16 %v158, %v145
    %v211 = vpack.c.b16 %v159, %v146
    %v212 = vpack.c.b16 %v160, %v147
    %v213 = vpack.c.b16 %v161, %v148
    %v214 = vpack.c.b16 %v162, %v149
    %v215 = vpack.c.b16 %v163, %v150
    %v216 = vpack.c.b16 %v164, %v151
    %v217 = vpack.c.b16 %v165, %v152
    %v218 = vpack.c.b16 %v166, %v153
    %v219 = vpack.c.b16 %v167, %v154
    %v220 = vpack.c.b16 %v168, %v155
    %v221 = vpack.c.b16 %v182, %v169
    %v222 = vpack.c.b16 %v183, %v170
    %v223 = vpack.c.b16 %v184, %v171
    %v224 = vpack.c.b16 %v185, %v172
    %v225 = vpack.c.b16 %v186, %v173
    %v226 = vpack.c.b16 %v187, %v174
    %v227 = vpack.c.b16 %v188, %v175
    %v228 = vpack.c.b16 %v189, %v176
    %v229 = vpack.c.b16 %v190, %v177
    %v230 = vpack.c.b16 %v191, %v178
    %v231 = vpack.c.b16 %v192, %v179
    %v232 = vpack.c.b16 %v193, %v180
    %v233 = vpack.c.b16 %v194, %v181
    %vm273 = vcmask 392192
    %v275 = vsel %vm273, %v32, 0
    %277 = vmatprep.subr.bf16.mxu0 %v196
    %278 = vmatpush1.bf16.msra.mxu0 %v195
    %279 = vmatprep.subr.bf16.mxu0 %v209
    %280 = vmatpush1.bf16.msra.mxu0 %v208
    %281 = vmatprep.subr.bf16.mxu0 %v222
    %282 = vmatpush1.bf16.msra.mxu0 %v221
    %283 = vmatprep.subr.bf16.mxu0 0
    %284 = vmatpush1.bf16.msra.mxu0 0
    %285 = vmatprep.subr.bf16.mxu0 0
    %286 = vmatpush1.bf16.msra.mxu0 0
    %287 = vmatprep.subr.bf16.mxu0 0
    %288 = vmatpush1.bf16.msra.mxu0 0
    %289 = vmatprep.subr.bf16.mxu0 0
    %290 = vmatpush1.bf16.msra.mxu0 0
    %291 = vmatprep.subr.bf16.mxu0 0
    %292 = vmatpush1.bf16.msra.mxu0 0
    %293 = vmatprep.subr.bf16.mxu0 0
    %294 = vmatpush1.bf16.msra.mxu0 0
    %295 = vmatprep.subr.bf16.mxu0 0
    %296 = vmatpush1.bf16.msra.mxu0 0
    %297 = vmatprep.subr.bf16.mxu0 0
    %298 = vmatpush1.bf16.msra.mxu0 0
    %299 = vmatprep.subr.bf16.mxu0 0
    %300 = vmatpush1.bf16.msra.mxu0 0
    %301 = vmatprep.subr.bf16.mxu0 0
    %302 = vmatpush1.bf16.msra.mxu0 0
    %303 = vmatprep.subr.bf16.mxu0 0
    %304 = vmatpush1.bf16.msra.mxu0 0
    %305 = vmatprep.subr.bf16.mxu0 0
    %306 = vmatpush1.bf16.msra.mxu0 0
    %307 = vmatprep.subr.bf16.mxu0 0
    %308 = vmatpush1.bf16.msra.mxu0 0
    %309 = vmatprep.mubr.bf16.mxu0 0
    %310 = vmatmul.mubr.bf16.gmra.mrb[0].mxu0 %v275
    %v311 = vpop.f32.mrb[0].mxu0
    %v312 = vadd.f32 0.0, %v311
    %v313 = vpop.f32.mrb[0].mxu0
    %v314 = vadd.f32 0.0, %v313
    %v315 = vpop.f32.mrb[0].mxu0
    %v316 = vpop.f32.mrb[0].mxu0
    %317 = vdwg.mxu0
    %318 = vmatprep.subr.bf16.mxu0 %v198
    %319 = vmatpush1.bf16.msra.mxu0 %v197
    %320 = vmatprep.subr.bf16.mxu0 %v211
    %321 = vmatpush1.bf16.msra.mxu0 %v210
    %322 = vmatprep.subr.bf16.mxu0 %v224
    %323 = vmatpush1.bf16.msra.mxu0 %v223
    %324 = vmatprep.subr.bf16.mxu0 0
    %325 = vmatpush1.bf16.msra.mxu0 0
    %326 = vmatprep.subr.bf16.mxu0 0
    %327 = vmatpush1.bf16.msra.mxu0 0
    %328 = vmatprep.subr.bf16.mxu0 0
    %329 = vmatpush1.bf16.msra.mxu0 0
    %330 = vmatprep.subr.bf16.mxu0 0
    %331 = vmatpush1.bf16.msra.mxu0 0
    %332 = vmatprep.subr.bf16.mxu0 0
    %333 = vmatpush1.bf16.msra.mxu0 0
    %334 = vmatprep.subr.bf16.mxu0 0
    %335 = vmatpush1.bf16.msra.mxu0 0
    %336 = vmatprep.subr.bf16.mxu0 0
    %337 = vmatpush1.bf16.msra.mxu0 0
    %338 = vmatprep.subr.bf16.mxu0 0
    %339 = vmatpush1.bf16.msra.mxu0 0
    %340 = vmatprep.subr.bf16.mxu0 0
    %341 = vmatpush1.bf16.msra.mxu0 0
    %342 = vmatprep.subr.bf16.mxu0 0
    %343 = vmatpush1.bf16.msra.mxu0 0
    %344 = vmatprep.subr.bf16.mxu0 0
    %345 = vmatpush1.bf16.msra.mxu0 0
    %346 = vmatprep.subr.bf16.mxu0 0
    %347 = vmatpush1.bf16.msra.mxu0 0
    %348 = vmatprep.subr.bf16.mxu0 0
    %349 = vmatpush1.bf16.msra.mxu0 0
    %350 = vmatprep.mubr.bf16.mxu0 0
    %351 = vmatmul.mubr.bf16.gmra.mrb[0].mxu0 %v275
    %v352 = vpop.f32.mrb[0].mxu0
    %v353 = vadd.f32 0.0, %v352
    %v354 = vpop.f32.mrb[0].mxu0
    %v355 = vadd.f32 0.0, %v354
    %v356 = vpop.f32.mrb[0].mxu0
    %v357 = vpop.f32.mrb[0].mxu0
    %358 = vdwg.mxu0
    %359 = vmatprep.subr.bf16.mxu0 %v200
    %360 = vmatpush1.bf16.msra.mxu0 %v199
    %361 = vmatprep.subr.bf16.mxu0 %v213
    %362 = vmatpush1.bf16.msra.mxu0 %v212
    %363 = vmatprep.subr.bf16.mxu0 %v226
    %364 = vmatpush1.bf16.msra.mxu0 %v225
    %365 = vmatprep.subr.bf16.mxu0 0
    %366 = vmatpush1.bf16.msra.mxu0 0
    %367 = vmatprep.subr.bf16.mxu0 0
    %368 = vmatpush1.bf16.msra.mxu0 0
    %369 = vmatprep.subr.bf16.mxu0 0
    %370 = vmatpush1.bf16.msra.mxu0 0
    %371 = vmatprep.subr.bf16.mxu0 0
    %372 = vmatpush1.bf16.msra.mxu0 0
    %373 = vmatprep.subr.bf16.mxu0 0
    %374 = vmatpush1.bf16.msra.mxu0 0
    %375 = vmatprep.subr.bf16.mxu0 0
    %376 = vmatpush1.bf16.msra.mxu0 0
    %377 = vmatprep.subr.bf16.mxu0 0
    %378 = vmatpush1.bf16.msra.mxu0 0
    %379 = vmatprep.subr.bf16.mxu0 0
    %380 = vmatpush1.bf16.msra.mxu0 0
    %381 = vmatprep.subr.bf16.mxu0 0
    %382 = vmatpush1.bf16.msra.mxu0 0
    %383 = vmatprep.subr.bf16.mxu0 0
    %384 = vmatpush1.bf16.msra.mxu0 0
    %385 = vmatprep.subr.bf16.mxu0 0
    %386 = vmatpush1.bf16.msra.mxu0 0
    %387 = vmatprep.subr.bf16.mxu0 0
    %388 = vmatpush1.bf16.msra.mxu0 0
    %389 = vmatprep.subr.bf16.mxu0 0
    %390 = vmatpush1.bf16.msra.mxu0 0
    %391 = vmatprep.mubr.bf16.mxu0 0
    %392 = vmatmul.mubr.bf16.gmra.mrb[0].mxu0 %v275
    %v393 = vpop.f32.mrb[0].mxu0
    %v394 = vadd.f32 0.0, %v393
    %v395 = vpop.f32.mrb[0].mxu0
    %v396 = vadd.f32 0.0, %v395
    %v397 = vpop.f32.mrb[0].mxu0
    %v398 = vpop.f32.mrb[0].mxu0
    %399 = vdwg.mxu0
    %400 = vmatprep.subr.bf16.mxu0 %v202
    %401 = vmatpush1.bf16.msra.mxu0 %v201
    %402 = vmatprep.subr.bf16.mxu0 %v215
    %403 = vmatpush1.bf16.msra.mxu0 %v214
    %404 = vmatprep.subr.bf16.mxu0 %v228
    %405 = vmatpush1.bf16.msra.mxu0 %v227
    %406 = vmatprep.subr.bf16.mxu0 0
    %407 = vmatpush1.bf16.msra.mxu0 0
    %408 = vmatprep.subr.bf16.mxu0 0
    %409 = vmatpush1.bf16.msra.mxu0 0
    %410 = vmatprep.subr.bf16.mxu0 0
    %411 = vmatpush1.bf16.msra.mxu0 0
    %412 = vmatprep.subr.bf16.mxu0 0
    %413 = vmatpush1.bf16.msra.mxu0 0
    %414 = vmatprep.subr.bf16.mxu0 0
    %415 = vmatpush1.bf16.msra.mxu0 0
    %416 = vmatprep.subr.bf16.mxu0 0
    %417 = vmatpush1.bf16.msra.mxu0 0
    %418 = vmatprep.subr.bf16.mxu0 0
    %419 = vmatpush1.bf16.msra.mxu0 0
    %420 = vmatprep.subr.bf16.mxu0 0
    %421 = vmatpush1.bf16.msra.mxu0 0
    %422 = vmatprep.subr.bf16.mxu0 0
    %423 = vmatpush1.bf16.msra.mxu0 0
    %424 = vmatprep.subr.bf16.mxu0 0
    %425 = vmatpush1.bf16.msra.mxu0 0
    %426 = vmatprep.subr.bf16.mxu0 0
    %427 = vmatpush1.bf16.msra.mxu0 0
    %428 = vmatprep.subr.bf16.mxu0 0
    %429 = vmatpush1.bf16.msra.mxu0 0
    %430 = vmatprep.subr.bf16.mxu0 0
    %431 = vmatpush1.bf16.msra.mxu0 0
    %432 = vmatprep.mubr.bf16.mxu0 0
    %433 = vmatmul.mubr.bf16.gmra.mrb[0].mxu0 %v275
    %v434 = vpop.f32.mrb[0].mxu0
    %v435 = vadd.f32 0.0, %v434
    %v436 = vpop.f32.mrb[0].mxu0
    %v437 = vadd.f32 0.0, %v436
    %v438 = vpop.f32.mrb[0].mxu0
    %v439 = vpop.f32.mrb[0].mxu0
    %440 = vdwg.mxu0
    %441 = vmatprep.subr.bf16.mxu0 %v204
    %442 = vmatpush1.bf16.msra.mxu0 %v203
    %443 = vmatprep.subr.bf16.mxu0 %v217
    %444 = vmatpush1.bf16.msra.mxu0 %v216
    %445 = vmatprep.subr.bf16.mxu0 %v230
    %446 = vmatpush1.bf16.msra.mxu0 %v229
    %447 = vmatprep.subr.bf16.mxu0 0
    %448 = vmatpush1.bf16.msra.mxu0 0
    %449 = vmatprep.subr.bf16.mxu0 0
    %450 = vmatpush1.bf16.msra.mxu0 0
    %451 = vmatprep.subr.bf16.mxu0 0
    %452 = vmatpush1.bf16.msra.mxu0 0
    %453 = vmatprep.subr.bf16.mxu0 0
    %454 = vmatpush1.bf16.msra.mxu0 0
    %455 = vmatprep.subr.bf16.mxu0 0
    %456 = vmatpush1.bf16.msra.mxu0 0
    %457 = vmatprep.subr.bf16.mxu0 0
    %458 = vmatpush1.bf16.msra.mxu0 0
    %459 = vmatprep.subr.bf16.mxu0 0
    %460 = vmatpush1.bf16.msra.mxu0 0
    %461 = vmatprep.subr.bf16.mxu0 0
    %462 = vmatpush1.bf16.msra.mxu0 0
    %463 = vmatprep.subr.bf16.mxu0 0
    %464 = vmatpush1.bf16.msra.mxu0 0
    %465 = vmatprep.subr.bf16.mxu0 0
    %466 = vmatpush1.bf16.msra.mxu0 0
    %467 = vmatprep.subr.bf16.mxu0 0
    %468 = vmatpush1.bf16.msra.mxu0 0
    %469 = vmatprep.subr.bf16.mxu0 0
    %470 = vmatpush1.bf16.msra.mxu0 0
    %471 = vmatprep.subr.bf16.mxu0 0
    %472 = vmatpush1.bf16.msra.mxu0 0
    %473 = vmatprep.mubr.bf16.mxu0 0
    %474 = vmatmul.mubr.bf16.gmra.mrb[0].mxu0 %v275
    %v475 = vpop.f32.mrb[0].mxu0
    %v476 = vadd.f32 0.0, %v475
    %v477 = vpop.f32.mrb[0].mxu0
    %v478 = vadd.f32 0.0, %v477
    %v479 = vpop.f32.mrb[0].mxu0
    %v480 = vpop.f32.mrb[0].mxu0
    %481 = vdwg.mxu0
    %482 = vmatprep.subr.bf16.mxu0 %v206
    %483 = vmatpush1.bf16.msra.mxu0 %v205
    %484 = vmatprep.subr.bf16.mxu0 %v219
    %485 = vmatpush1.bf16.msra.mxu0 %v218
    %486 = vmatprep.subr.bf16.mxu0 %v232
    %487 = vmatpush1.bf16.msra.mxu0 %v231
    %488 = vmatprep.subr.bf16.mxu0 0
    %489 = vmatpush1.bf16.msra.mxu0 0
    %490 = vmatprep.subr.bf16.mxu0 0
    %491 = vmatpush1.bf16.msra.mxu0 0
    %492 = vmatprep.subr.bf16.mxu0 0
    %493 = vmatpush1.bf16.msra.mxu0 0
    %494 = vmatprep.subr.bf16.mxu0 0
    %495 = vmatpush1.bf16.msra.mxu0 0
    %496 = vmatprep.subr.bf16.mxu0 0
    %497 = vmatpush1.bf16.msra.mxu0 0
    %498 = vmatprep.subr.bf16.mxu0 0
    %499 = vmatpush1.bf16.msra.mxu0 0
    %500 = vmatprep.subr.bf16.mxu0 0
    %501 = vmatpush1.bf16.msra.mxu0 0
    %502 = vmatprep.subr.bf16.mxu0 0
    %503 = vmatpush1.bf16.msra.mxu0 0
    %504 = vmatprep.subr.bf16.mxu0 0
    %505 = vmatpush1.bf16.msra.mxu0 0
    %506 = vmatprep.subr.bf16.mxu0 0
    %507 = vmatpush1.bf16.msra.mxu0 0
    %508 = vmatprep.subr.bf16.mxu0 0
    %509 = vmatpush1.bf16.msra.mxu0 0
    %510 = vmatprep.subr.bf16.mxu0 0
    %511 = vmatpush1.bf16.msra.mxu0 0
    %512 = vmatprep.subr.bf16.mxu0 0
    %513 = vmatpush1.bf16.msra.mxu0 0
    %514 = vmatprep.mubr.bf16.mxu0 0
    %515 = vmatmul.mubr.bf16.gmra.mrb[0].mxu0 %v275
    %v516 = vpop.f32.mrb[0].mxu0
    %v517 = vadd.f32 0.0, %v516
    %v518 = vpop.f32.mrb[0].mxu0
    %v519 = vadd.f32 0.0, %v518
    %v520 = vpop.f32.mrb[0].mxu0
    %v521 = vpop.f32.mrb[0].mxu0
    %522 = vdwg.mxu0
    %523 = vmatprep.subr.bf16.mxu0 0
    %524 = vmatpush1.bf16.msra.mxu0 %v207
    %525 = vmatprep.subr.bf16.mxu0 0
    %526 = vmatpush1.bf16.msra.mxu0 %v220
    %527 = vmatprep.subr.bf16.mxu0 0
    %528 = vmatpush1.bf16.msra.mxu0 %v233
    %529 = vmatprep.subr.bf16.mxu0 0
    %530 = vmatpush1.bf16.msra.mxu0 0
    %531 = vmatprep.subr.bf16.mxu0 0
    %532 = vmatpush1.bf16.msra.mxu0 0
    %533 = vmatprep.subr.bf16.mxu0 0
    %534 = vmatpush1.bf16.msra.mxu0 0
    %535 = vmatprep.subr.bf16.mxu0 0
    %536 = vmatpush1.bf16.msra.mxu0 0
    %537 = vmatprep.subr.bf16.mxu0 0
    %538 = vmatpush1.bf16.msra.mxu0 0
    %539 = vmatprep.subr.bf16.mxu0 0
    %540 = vmatpush1.bf16.msra.mxu0 0
    %541 = vmatprep.subr.bf16.mxu0 0
    %542 = vmatpush1.bf16.msra.mxu0 0
    %543 = vmatprep.subr.bf16.mxu0 0
    %544 = vmatpush1.bf16.msra.mxu0 0
    %545 = vmatprep.subr.bf16.mxu0 0
    %546 = vmatpush1.bf16.msra.mxu0 0
    %547 = vmatprep.subr.bf16.mxu0 0
    %548 = vmatpush1.bf16.msra.mxu0 0
    %549 = vmatprep.subr.bf16.mxu0 0
    %550 = vmatpush1.bf16.msra.mxu0 0
    %551 = vmatprep.subr.bf16.mxu0 0
    %552 = vmatpush1.bf16.msra.mxu0 0
    %553 = vmatprep.subr.bf16.mxu0 0
    %554 = vmatpush1.bf16.msra.mxu0 0
    %555 = vmatprep.mubr.bf16.mxu0 0
    %556 = vmatmul.mubr.bf16.gmra.mrb[0].mxu0 %v275
    %v557 = vpop.f32.mrb[0].mxu0
    %v558 = vadd.f32 0.0, %v557
    %v559 = vpop.f32.mrb[0].mxu0
    %v560 = vpop.f32.mrb[0].mxu0
    %v561 = vpop.f32.mrb[0].mxu0
    %562 = vdwg.mxu0
    %v563 = vld [vmem:[%s3] sm:$0xff]
    %v564 = vld [vmem:[%s3 + $0x8] sm:$0x1]
    %v565 = vld [vmem:[%s2] sm:$0xf]
    %v566 = vld [vmem:[%s2 + $0x4] sm:$0xf]
    %v567 = vld [vmem:[%s2 + $0x8] sm:$0xf]
    %v568 = vld [vmem:[%s2 + $0xc] sm:$0xf]
    %v569 = vld [vmem:[%s2 + $0x10] sm:$0xf]
    %v570 = vld [vmem:[%s2 + $0x14] sm:$0xf]
    %v571 = vld [vmem:[%s2 + $0x18] sm:$0xf]
    %v572 = vld [vmem:[%s2 + $0x1c] sm:$0xf]
    %v573 = vld [vmem:[%s2 + $0x20] sm:$0xf]
    %v574 = vld [vmem:[%s2 + $0x24] sm:$0xf]
    %v575 = vld [vmem:[%s2 + $0x28] sm:$0xf]
    %v576 = vld [vmem:[%s2 + $0x2c] sm:$0xf]
    %v577 = vld [vmem:[%s2 + $0x30] sm:$0xf]
    %v578 = vld [vmem:[%s2 + $0x34] sm:$0xf]
    %v579 = vld [vmem:[%s2 + $0x38] sm:$0xf]
    %v580 = vld [vmem:[%s2 + $0x3c] sm:$0xf]
    %v581 = vld [vmem:[%s2 + $0x40] sm:$0xf]
    %v582 = vld [vmem:[%s2 + $0x44] sm:$0xf]
    %v583 = vld [vmem:[%s2 + $0x48] sm:$0xf]
    %v584 = vld [vmem:[%s2 + $0x4c] sm:$0xf]
    %v585 = vld [vmem:[%s2 + $0x50] sm:$0xf]
    %v586 = vld [vmem:[%s2 + $0x54] sm:$0xf]
    %v587 = vld [vmem:[%s2 + $0x58] sm:$0xf]
    %v588 = vld [vmem:[%s2 + $0x5c] sm:$0xf]
    %v589 = vld [vmem:[%s2 + $0x60] sm:$0xf]
    %v590 = vld [vmem:[%s2 + $0x64] sm:$0xf]
    %v591 = vld [vmem:[%s2 + $0x68] sm:$0xf]
    %v592 = vld [vmem:[%s2 + $0x6c] sm:$0xf]
    %v593 = vld [vmem:[%s2 + $0x70] sm:$0xf]
    %v594 = vld [vmem:[%s2 + $0x74] sm:$0xf]
    %v595 = vld [vmem:[%s2 + $0x78] sm:$0xf]
    %v596 = vld [vmem:[%s2 + $0x7c] sm:$0xf]
    %v597 = vld [vmem:[%s2 + $0x80] sm:$0xf]
    %v598 = vld [vmem:[%s2 + $0x84] sm:$0xf]
    %v599 = vld [vmem:[%s2 + $0x88] sm:$0xf]
    %v600 = vld [vmem:[%s2 + $0x8c] sm:$0xf]
    %v601 = vld [vmem:[%s2 + $0x90] sm:$0xf]
    %v602 = vld [vmem:[%s2 + $0x94] sm:$0xf]
    %v603 = vld [vmem:[%s2 + $0x98] sm:$0xf]
    %v604 = vld [vmem:[%s2 + $0x9c] sm:$0xf]
    %v605 = vld [vmem:[%s2 + $0xa0] sm:$0xf]
    %v606 = vld [vmem:[%s2 + $0xa4] sm:$0xf]
    %v607 = vld [vmem:[%s2 + $0xa8] sm:$0xf]
    %v608 = vld [vmem:[%s2 + $0xac] sm:$0xf]
    %v609 = vld [vmem:[%s2 + $0xb0] sm:$0xf]
    %v610 = vld [vmem:[%s2 + $0xb4] sm:$0xf]
    %v611 = vld [vmem:[%s2 + $0xb8] sm:$0xf]
    %v612 = vld [vmem:[%s2 + $0xbc] sm:$0xf]
    %v613 = vld [vmem:[%s2 + $0xc0] sm:$0xf]
    %v614 = vld [vmem:[%s2 + $0xc4] sm:$0xf]
    %v615 = vld [vmem:[%s2 + $0xc8] sm:$0xf]
    %v616 = vld [vmem:[%s2 + $0xcc] sm:$0xf]
    %v617 = vld [vmem:[%s2 + $0xd0] sm:$0xf]
    %v618 = vld [vmem:[%s2 + $0xd4] sm:$0xf]
    %v619 = vld [vmem:[%s2 + $0xd8] sm:$0xf]
    %v620 = vld [vmem:[%s2 + $0xdc] sm:$0xf]
    %v621 = vlaneseq
    %v622 = vshrl.u32 %v621, 7
    %v623 = vsub.s32 0, %v622
    %v624 = vrot.slane %v563, %v623
    %v625 = vadd.f32 %v558, %v624
    %vm626 = vcmp.ge.f32.partialorder %v625, 0.0
    %v627 = vmul.f32 %v625, 0.01
    %v628 = vsel %vm626, %v625, %v627
    %v629 = vpack.c.bf16 %v628, %v628
    %v630 = vlaneseq
    %v631 = vshrl.u32 %v630, 7
    %v632 = vsub.s32 1, %v631
    %v633 = vrot.slane %v563, %v632
    %v638 = vunpack.c.l.b16 %v597
    %v639 = vunpack.c.l.b16 %v598
    %v640 = vunpack.c.l.b16 %v599
    %v641 = vunpack.c.l.b16 %v600
    %v642 = vpack.c.b16 %v639, %v638
    %v643 = vpack.c.b16 %v641, %v640
    %vm646 = vcmask 261120
    %v648 = vsel %vm646, %v629, 0
    %650 = vmatprep.subr.bf16.mxu0 0
    %651 = vmatpush1.bf16.msra.mxu0 %v642
    %652 = vmatprep.subr.bf16.mxu0 0
    %653 = vmatpush1.bf16.msra.mxu0 %v643
    %654 = vmatprep.subr.bf16.mxu0 0
    %655 = vmatpush1.bf16.msra.mxu0 0
    %656 = vmatprep.subr.bf16.mxu0 0
    %657 = vmatpush1.bf16.msra.mxu0 0
    %658 = vmatprep.subr.bf16.mxu0 0
    %659 = vmatpush1.bf16.msra.mxu0 0
    %660 = vmatprep.subr.bf16.mxu0 0
    %661 = vmatpush1.bf16.msra.mxu0 0
    %662 = vmatprep.subr.bf16.mxu0 0
    %663 = vmatpush1.bf16.msra.mxu0 0
    %664 = vmatprep.subr.bf16.mxu0 0
    %665 = vmatpush1.bf16.msra.mxu0 0
    %666 = vmatprep.subr.bf16.mxu0 0
    %667 = vmatpush1.bf16.msra.mxu0 0
    %668 = vmatprep.subr.bf16.mxu0 0
    %669 = vmatpush1.bf16.msra.mxu0 0
    %670 = vmatprep.subr.bf16.mxu0 0
    %671 = vmatpush1.bf16.msra.mxu0 0
    %672 = vmatprep.subr.bf16.mxu0 0
    %673 = vmatpush1.bf16.msra.mxu0 0
    %674 = vmatprep.subr.bf16.mxu0 0
    %675 = vmatpush1.bf16.msra.mxu0 0
    %676 = vmatprep.subr.bf16.mxu0 0
    %677 = vmatpush1.bf16.msra.mxu0 0
    %678 = vmatprep.subr.bf16.mxu0 0
    %679 = vmatpush1.bf16.msra.mxu0 0
    %680 = vmatprep.subr.bf16.mxu0 0
    %681 = vmatpush1.bf16.msra.mxu0 0
    %682 = vmatprep.mubr.bf16.mxu0 0
    %683 = vmatmul.mubr.bf16.gmra.mrb[0].mxu0 %v648
    %v684 = vpop.f32.mrb[0].mxu0
    %v685 = vadd.f32 %v633, %v684
    %v686 = vpop.f32.mrb[0].mxu0
    %v687 = vpop.f32.mrb[0].mxu0
    %v688 = vpop.f32.mrb[0].mxu0
    %689 = vdwg.mxu0
    %vm690 = vcmp.ge.f32.partialorder %v685, 0.0
    %v691 = vmul.f32 %v685, 0.01
    %v692 = vsel %vm690, %v685, %v691
    %v693 = vpack.c.bf16 %v692, %v692
    %v694 = vlaneseq
    %v695 = vshrl.u32 %v694, 7
    %v696 = vsub.s32 2, %v695
    %v697 = vrot.slane %v563, %v696
    %v702 = vunpack.c.l.b16 %v601
    %v703 = vunpack.c.l.b16 %v602
    %v704 = vunpack.c.l.b16 %v603
    %v705 = vunpack.c.l.b16 %v604
    %v706 = vpack.c.b16 %v703, %v702
    %v707 = vpack.c.b16 %v705, %v704
    %v711 = vsel %vm646, %v693, 0
    %713 = vmatprep.subr.bf16.mxu0 0
    %714 = vmatpush1.bf16.msra.mxu0 %v706
    %715 = vmatprep.subr.bf16.mxu0 0
    %716 = vmatpush1.bf16.msra.mxu0 %v707
    %717 = vmatprep.subr.bf16.mxu0 0
    %718 = vmatpush1.bf16.msra.mxu0 0
    %719 = vmatprep.subr.bf16.mxu0 0
    %720 = vmatpush1.bf16.msra.mxu0 0
    %721 = vmatprep.subr.bf16.mxu0 0
    %722 = vmatpush1.bf16.msra.mxu0 0
    %723 = vmatprep.subr.bf16.mxu0 0
    %724 = vmatpush1.bf16.msra.mxu0 0
    %725 = vmatprep.subr.bf16.mxu0 0
    %726 = vmatpush1.bf16.msra.mxu0 0
    %727 = vmatprep.subr.bf16.mxu0 0
    %728 = vmatpush1.bf16.msra.mxu0 0
    %729 = vmatprep.subr.bf16.mxu0 0
    %730 = vmatpush1.bf16.msra.mxu0 0
    %731 = vmatprep.subr.bf16.mxu0 0
    %732 = vmatpush1.bf16.msra.mxu0 0
    %733 = vmatprep.subr.bf16.mxu0 0
    %734 = vmatpush1.bf16.msra.mxu0 0
    %735 = vmatprep.subr.bf16.mxu0 0
    %736 = vmatpush1.bf16.msra.mxu0 0
    %737 = vmatprep.subr.bf16.mxu0 0
    %738 = vmatpush1.bf16.msra.mxu0 0
    %739 = vmatprep.subr.bf16.mxu0 0
    %740 = vmatpush1.bf16.msra.mxu0 0
    %741 = vmatprep.subr.bf16.mxu0 0
    %742 = vmatpush1.bf16.msra.mxu0 0
    %743 = vmatprep.subr.bf16.mxu0 0
    %744 = vmatpush1.bf16.msra.mxu0 0
    %745 = vmatprep.mubr.bf16.mxu0 0
    %746 = vmatmul.mubr.bf16.gmra.mrb[0].mxu0 %v711
    %v747 = vpop.f32.mrb[0].mxu0
    %v748 = vadd.f32 %v697, %v747
    %v749 = vpop.f32.mrb[0].mxu0
    %v750 = vpop.f32.mrb[0].mxu0
    %v751 = vpop.f32.mrb[0].mxu0
    %752 = vdwg.mxu0
    %vm753 = vcmp.ge.f32.partialorder %v748, 0.0
    %v754 = vmul.f32 %v748, 0.01
    %v755 = vsel %vm753, %v748, %v754
    %v756 = vadd.f32 %v628, %v755
    %vm757 = vcmp.ge.f32.partialorder %v756, 0.0
    %v758 = vmul.f32 %v756, 0.01
    %v759 = vsel %vm757, %v756, %v758
    %v760 = vpack.c.bf16 %v759, %v759
    %v761 = vlaneseq
    %v762 = vshrl.u32 %v761, 7
    %v763 = vsub.s32 3, %v762
    %v764 = vrot.slane %v563, %v763
    %v769 = vunpack.c.l.b16 %v605
    %v770 = vunpack.c.l.b16 %v606
    %v771 = vunpack.c.l.b16 %v607
    %v772 = vunpack.c.l.b16 %v608
    %v773 = vpack.c.b16 %v770, %v769
    %v774 = vpack.c.b16 %v772, %v771
    %v778 = vsel %vm646, %v760, 0
    %780 = vmatprep.subr.bf16.mxu0 0
    %781 = vmatpush1.bf16.msra.mxu0 %v773
    %782 = vmatprep.subr.bf16.mxu0 0
    %783 = vmatpush1.bf16.msra.mxu0 %v774
    %784 = vmatprep.subr.bf16.mxu0 0
    %785 = vmatpush1.bf16.msra.mxu0 0
    %786 = vmatprep.subr.bf16.mxu0 0
    %787 = vmatpush1.bf16.msra.mxu0 0
    %788 = vmatprep.subr.bf16.mxu0 0
    %789 = vmatpush1.bf16.msra.mxu0 0
    %790 = vmatprep.subr.bf16.mxu0 0
    %791 = vmatpush1.bf16.msra.mxu0 0
    %792 = vmatprep.subr.bf16.mxu0 0
    %793 = vmatpush1.bf16.msra.mxu0 0
    %794 = vmatprep.subr.bf16.mxu0 0
    %795 = vmatpush1.bf16.msra.mxu0 0
    %796 = vmatprep.subr.bf16.mxu0 0
    %797 = vmatpush1.bf16.msra.mxu0 0
    %798 = vmatprep.subr.bf16.mxu0 0
    %799 = vmatpush1.bf16.msra.mxu0 0
    %800 = vmatprep.subr.bf16.mxu0 0
    %801 = vmatpush1.bf16.msra.mxu0 0
    %802 = vmatprep.subr.bf16.mxu0 0
    %803 = vmatpush1.bf16.msra.mxu0 0
    %804 = vmatprep.subr.bf16.mxu0 0
    %805 = vmatpush1.bf16.msra.mxu0 0
    %806 = vmatprep.subr.bf16.mxu0 0
    %807 = vmatpush1.bf16.msra.mxu0 0
    %808 = vmatprep.subr.bf16.mxu0 0
    %809 = vmatpush1.bf16.msra.mxu0 0
    %810 = vmatprep.subr.bf16.mxu0 0
    %811 = vmatpush1.bf16.msra.mxu0 0
    %812 = vmatprep.mubr.bf16.mxu0 0
    %813 = vmatmul.mubr.bf16.gmra.mrb[0].mxu0 %v778
    %v814 = vpop.f32.mrb[0].mxu0
    %v815 = vadd.f32 %v764, %v814
    %v816 = vpop.f32.mrb[0].mxu0
    %v817 = vpop.f32.mrb[0].mxu0
    %v818 = vpop.f32.mrb[0].mxu0
    %819 = vdwg.mxu0
    %v820 = vmul.f32 %v312, %v435
    %v821 = vmul.f32 %v314, %v437
    %v822 = vmul.f32 %v353, %v476
    %v823 = vmul.f32 %v355, %v478
    %v824 = vmul.f32 %v394, %v517
    %v825 = vmul.f32 %v396, %v519
    %v826 = vadd.f32 %v820, %v822
    %v827 = vadd.f32 %v821, %v823
    %v828 = vadd.f32 %v826, %v824
    %v829 = vadd.f32 %v827, %v825
    %v830 = vpack.c.bf16 %v828, %v828
    %v831 = vpack.c.bf16 %v829, %v829
    %v832 = vlaneseq
    %v833 = vshrl.u32 %v832, 7
    %v834 = vsub.s32 4, %v833
    %v835 = vrot.slane %v563, %v834
    %v868 = vunpack.c.l.b16 %v565
    %v869 = vunpack.c.l.b16 %v566
    %v870 = vunpack.c.l.b16 %v567
    %v871 = vunpack.c.l.b16 %v568
    %v872 = vunpack.c.l.b16 %v569
    %v873 = vunpack.c.l.b16 %v570
    %v874 = vunpack.c.l.b16 %v571
    %v875 = vunpack.c.l.b16 %v572
    %v876 = vunpack.c.l.b16 %v573
    %v877 = vunpack.c.l.b16 %v574
    %v878 = vunpack.c.l.b16 %v575
    %v879 = vunpack.c.l.b16 %v576
    %v880 = vunpack.c.l.b16 %v577
    %v881 = vunpack.c.l.b16 %v578
    %v882 = vunpack.c.l.b16 %v579
    %v883 = vunpack.c.l.b16 %v580
    %v884 = vunpack.c.l.b16 %v581
    %v885 = vunpack.c.l.b16 %v582
    %v886 = vunpack.c.l.b16 %v583
    %v887 = vunpack.c.l.b16 %v584
    %v888 = vunpack.c.l.b16 %v585
    %v889 = vunpack.c.l.b16 %v586
    %v890 = vunpack.c.l.b16 %v587
    %v891 = vunpack.c.l.b16 %v588
    %v892 = vunpack.c.l.b16 %v589
    %v893 = vunpack.c.l.b16 %v590
    %v894 = vunpack.c.l.b16 %v591
    %v895 = vunpack.c.l.b16 %v592
    %v896 = vunpack.c.l.b16 %v593
    %v897 = vunpack.c.l.b16 %v594
    %v898 = vunpack.c.l.b16 %v595
    %v899 = vunpack.c.l.b16 %v596
    %v900 = vpack.c.b16 %v869, %v868
    %v901 = vpack.c.b16 %v871, %v870
    %v902 = vpack.c.b16 %v873, %v872
    %v903 = vpack.c.b16 %v875, %v874
    %v904 = vpack.c.b16 %v877, %v876
    %v905 = vpack.c.b16 %v879, %v878
    %v906 = vpack.c.b16 %v881, %v880
    %v907 = vpack.c.b16 %v883, %v882
    %v908 = vpack.c.b16 %v885, %v884
    %v909 = vpack.c.b16 %v887, %v886
    %v910 = vpack.c.b16 %v889, %v888
    %v911 = vpack.c.b16 %v891, %v890
    %v912 = vpack.c.b16 %v893, %v892
    %v913 = vpack.c.b16 %v895, %v894
    %v914 = vpack.c.b16 %v897, %v896
    %v915 = vpack.c.b16 %v899, %v898
    %932 = vmatprep.subr.bf16.mxu0 0
    %933 = vmatpush1.bf16.msra.mxu0 %v900
    %934 = vmatprep.subr.bf16.mxu0 0
    %935 = vmatpush1.bf16.msra.mxu0 %v901
    %936 = vmatprep.subr.bf16.mxu0 0
    %937 = vmatpush1.bf16.msra.mxu0 %v902
    %938 = vmatprep.subr.bf16.mxu0 0
    %939 = vmatpush1.bf16.msra.mxu0 %v903
    %940 = vmatprep.subr.bf16.mxu0 0
    %941 = vmatpush1.bf16.msra.mxu0 %v904
    %942 = vmatprep.subr.bf16.mxu0 0
    %943 = vmatpush1.bf16.msra.mxu0 %v905
    %944 = vmatprep.subr.bf16.mxu0 0
    %945 = vmatpush1.bf16.msra.mxu0 %v906
    %946 = vmatprep.subr.bf16.mxu0 0
    %947 = vmatpush1.bf16.msra.mxu0 %v907
    %948 = vmatprep.subr.bf16.mxu0 0
    %949 = vmatpush1.bf16.msra.mxu0 %v908
    %950 = vmatprep.subr.bf16.mxu0 0
    %951 = vmatpush1.bf16.msra.mxu0 %v909
    %952 = vmatprep.subr.bf16.mxu0 0
    %953 = vmatpush1.bf16.msra.mxu0 %v910
    %954 = vmatprep.subr.bf16.mxu0 0
    %955 = vmatpush1.bf16.msra.mxu0 %v911
    %956 = vmatprep.subr.bf16.mxu0 0
    %957 = vmatpush1.bf16.msra.mxu0 %v912
    %958 = vmatprep.subr.bf16.mxu0 0
    %959 = vmatpush1.bf16.msra.mxu0 %v913
    %960 = vmatprep.subr.bf16.mxu0 0
    %961 = vmatpush1.bf16.msra.mxu0 %v914
    %962 = vmatprep.subr.bf16.mxu0 0
    %963 = vmatpush1.bf16.msra.mxu0 %v915
    %964 = vmatprep.mubr.bf16.mxu0 %v831
    %965 = vmatmul.mubr.bf16.gmra.mrb[0].mxu0 %v830
    %v966 = vpop.f32.mrb[0].mxu0
    %v967 = vadd.f32 %v835, %v966
    %v968 = vpop.f32.mrb[0].mxu0
    %v969 = vpop.f32.mrb[0].mxu0
    %v970 = vpop.f32.mrb[0].mxu0
    %971 = vdwg.mxu0
    %vm972 = vcmp.ge.f32.partialorder %v967, 0.0
    %v973 = vmul.f32 %v967, 0.01
    %v974 = vsel %vm972, %v967, %v973
    %v975 = vpack.c.bf16 %v974, %v974
    %v976 = vlaneseq
    %v977 = vshrl.u32 %v976, 7
    %v978 = vsub.s32 5, %v977
    %v979 = vrot.slane %v563, %v978
    %v984 = vunpack.c.l.b16 %v609
    %v985 = vunpack.c.l.b16 %v610
    %v986 = vunpack.c.l.b16 %v611
    %v987 = vunpack.c.l.b16 %v612
    %v988 = vpack.c.b16 %v985, %v984
    %v989 = vpack.c.b16 %v987, %v986
    %v993 = vsel %vm646, %v975, 0
    %995 = vmatprep.subr.bf16.mxu0 0
    %996 = vmatpush1.bf16.msra.mxu0 %v988
    %997 = vmatprep.subr.bf16.mxu0 0
    %998 = vmatpush1.bf16.msra.mxu0 %v989
    %999 = vmatprep.subr.bf16.mxu0 0
    %1000 = vmatpush1.bf16.msra.mxu0 0
    %1001 = vmatprep.subr.bf16.mxu0 0
    %1002 = vmatpush1.bf16.msra.mxu0 0
    %1003 = vmatprep.subr.bf16.mxu0 0
    %1004 = vmatpush1.bf16.msra.mxu0 0
    %1005 = vmatprep.subr.bf16.mxu0 0
    %1006 = vmatpush1.bf16.msra.mxu0 0
    %1007 = vmatprep.subr.bf16.mxu0 0
    %1008 = vmatpush1.bf16.msra.mxu0 0
    %1009 = vmatprep.subr.bf16.mxu0 0
    %1010 = vmatpush1.bf16.msra.mxu0 0
    %1011 = vmatprep.subr.bf16.mxu0 0
    %1012 = vmatpush1.bf16.msra.mxu0 0
    %1013 = vmatprep.subr.bf16.mxu0 0
    %1014 = vmatpush1.bf16.msra.mxu0 0
    %1015 = vmatprep.subr.bf16.mxu0 0
    %1016 = vmatpush1.bf16.msra.mxu0 0
    %1017 = vmatprep.subr.bf16.mxu0 0
    %1018 = vmatpush1.bf16.msra.mxu0 0
    %1019 = vmatprep.subr.bf16.mxu0 0
    %1020 = vmatpush1.bf16.msra.mxu0 0
    %1021 = vmatprep.subr.bf16.mxu0 0
    %1022 = vmatpush1.bf16.msra.mxu0 0
    %1023 = vmatprep.subr.bf16.mxu0 0
    %1024 = vmatpush1.bf16.msra.mxu0 0
    %1025 = vmatprep.subr.bf16.mxu0 0
    %1026 = vmatpush1.bf16.msra.mxu0 0
    %1027 = vmatprep.mubr.bf16.mxu0 0
    %1028 = vmatmul.mubr.bf16.gmra.mrb[0].mxu0 %v993
    %v1029 = vpop.f32.mrb[0].mxu0
    %v1030 = vadd.f32 %v979, %v1029
    %v1031 = vpop.f32.mrb[0].mxu0
    %v1032 = vpop.f32.mrb[0].mxu0
    %v1033 = vpop.f32.mrb[0].mxu0
    %1034 = vdwg.mxu0
    %vm1035 = vcmp.ge.f32.partialorder %v1030, 0.0
    %v1036 = vmul.f32 %v1030, 0.01
    %v1037 = vsel %vm1035, %v1030, %v1036
    %v1038 = vpack.c.bf16 %v1037, %v1037
    %v1040 = vsel %vm646, %v1038, 0
    %1042 = vmatprep.subr.bf16.mxu0 0
    %1043 = vmatpush1.bf16.msra.mxu0 %v988
    %1044 = vmatprep.subr.bf16.mxu0 0
    %1045 = vmatpush1.bf16.msra.mxu0 %v989
    %1046 = vmatprep.subr.bf16.mxu0 0
    %1047 = vmatpush1.bf16.msra.mxu0 0
    %1048 = vmatprep.subr.bf16.mxu0 0
    %1049 = vmatpush1.bf16.msra.mxu0 0
    %1050 = vmatprep.subr.bf16.mxu0 0
    %1051 = vmatpush1.bf16.msra.mxu0 0
    %1052 = vmatprep.subr.bf16.mxu0 0
    %1053 = vmatpush1.bf16.msra.mxu0 0
    %1054 = vmatprep.subr.bf16.mxu0 0
    %1055 = vmatpush1.bf16.msra.mxu0 0
    %1056 = vmatprep.subr.bf16.mxu0 0
    %1057 = vmatpush1.bf16.msra.mxu0 0
    %1058 = vmatprep.subr.bf16.mxu0 0
    %1059 = vmatpush1.bf16.msra.mxu0 0
    %1060 = vmatprep.subr.bf16.mxu0 0
    %1061 = vmatpush1.bf16.msra.mxu0 0
    %1062 = vmatprep.subr.bf16.mxu0 0
    %1063 = vmatpush1.bf16.msra.mxu0 0
    %1064 = vmatprep.subr.bf16.mxu0 0
    %1065 = vmatpush1.bf16.msra.mxu0 0
    %1066 = vmatprep.subr.bf16.mxu0 0
    %1067 = vmatpush1.bf16.msra.mxu0 0
    %1068 = vmatprep.subr.bf16.mxu0 0
    %1069 = vmatpush1.bf16.msra.mxu0 0
    %1070 = vmatprep.subr.bf16.mxu0 0
    %1071 = vmatpush1.bf16.msra.mxu0 0
    %1072 = vmatprep.subr.bf16.mxu0 0
    %1073 = vmatpush1.bf16.msra.mxu0 0
    %1074 = vmatprep.mubr.bf16.mxu0 0
    %1075 = vmatmul.mubr.bf16.gmra.mrb[0].mxu0 %v1040
    %v1076 = vpop.f32.mrb[0].mxu0
    %v1077 = vadd.f32 %v979, %v1076
    %v1078 = vpop.f32.mrb[0].mxu0
    %v1079 = vpop.f32.mrb[0].mxu0
    %v1080 = vpop.f32.mrb[0].mxu0
    %1081 = vdwg.mxu0
    %vm1082 = vcmp.ge.f32.partialorder %v1077, 0.0
    %v1083 = vmul.f32 %v1077, 0.01
    %v1084 = vsel %vm1082, %v1077, %v1083
    %v1085 = vadd.f32 %v974, %v1084
    %v1086 = vpack.c.bf16 %v815, %v815
    %v1087 = vpack.c.bf16 %v1085, %v1085
    %v1092 = vunpack.c.l.b16 %v617
    %v1093 = vunpack.c.l.b16 %v618
    %v1094 = vunpack.c.l.b16 %v619
    %v1095 = vunpack.c.l.b16 %v620
    %v1096 = vpack.c.b16 %v1093, %v1092
    %v1097 = vpack.c.b16 %v1095, %v1094
    %v1101 = vsel %vm646, %v1087, 0
    %1103 = vmatprep.subr.bf16.mxu0 0
    %1104 = vmatpush1.bf16.msra.mxu0 %v1096
    %1105 = vmatprep.subr.bf16.mxu0 0
    %1106 = vmatpush1.bf16.msra.mxu0 %v1097
    %1107 = vmatprep.subr.bf16.mxu0 0
    %1108 = vmatpush1.bf16.msra.mxu0 0
    %1109 = vmatprep.subr.bf16.mxu0 0
    %1110 = vmatpush1.bf16.msra.mxu0 0
    %1111 = vmatprep.subr.bf16.mxu0 0
    %1112 = vmatpush1.bf16.msra.mxu0 0
    %1113 = vmatprep.subr.bf16.mxu0 0
    %1114 = vmatpush1.bf16.msra.mxu0 0
    %1115 = vmatprep.subr.bf16.mxu0 0
    %1116 = vmatpush1.bf16.msra.mxu0 0
    %1117 = vmatprep.subr.bf16.mxu0 0
    %1118 = vmatpush1.bf16.msra.mxu0 0
    %1119 = vmatprep.subr.bf16.mxu0 0
    %1120 = vmatpush1.bf16.msra.mxu0 0
    %1121 = vmatprep.subr.bf16.mxu0 0
    %1122 = vmatpush1.bf16.msra.mxu0 0
    %1123 = vmatprep.subr.bf16.mxu0 0
    %1124 = vmatpush1.bf16.msra.mxu0 0
    %1125 = vmatprep.subr.bf16.mxu0 0
    %1126 = vmatpush1.bf16.msra.mxu0 0
    %1127 = vmatprep.subr.bf16.mxu0 0
    %1128 = vmatpush1.bf16.msra.mxu0 0
    %1129 = vmatprep.subr.bf16.mxu0 0
    %1130 = vmatpush1.bf16.msra.mxu0 0
    %1131 = vmatprep.subr.bf16.mxu0 0
    %1132 = vmatpush1.bf16.msra.mxu0 0
    %1133 = vmatprep.subr.bf16.mxu0 0
    %1134 = vmatpush1.bf16.msra.mxu0 0
    %1135 = vmatprep.mubr.bf16.mxu0 0
    %1136 = vmatmul.mubr.bf16.gmra.mrb[0].mxu0 %v1101
    %v1137 = vpop.f32.mrb[0].mxu0
    %v1138 = vadd.f32 0.0, %v1137
    %v1139 = vpop.f32.mrb[0].mxu0
    %v1140 = vpop.f32.mrb[0].mxu0
    %v1141 = vpop.f32.mrb[0].mxu0
    %1142 = vdwg.mxu0
    %v1147 = vunpack.c.l.b16 %v613
    %v1148 = vunpack.c.l.b16 %v614
    %v1149 = vunpack.c.l.b16 %v615
    %v1150 = vunpack.c.l.b16 %v616
    %v1151 = vpack.c.b16 %v1148, %v1147
    %v1152 = vpack.c.b16 %v1150, %v1149
    %v1156 = vsel %vm646, %v1086, 0
    %1158 = vmatprep.subr.bf16.mxu0 0
    %1159 = vmatpush1.bf16.msra.mxu0 %v1151
    %1160 = vmatprep.subr.bf16.mxu0 0
    %1161 = vmatpush1.bf16.msra.mxu0 %v1152
    %1162 = vmatprep.subr.bf16.mxu0 0
    %1163 = vmatpush1.bf16.msra.mxu0 0
    %1164 = vmatprep.subr.bf16.mxu0 0
    %1165 = vmatpush1.bf16.msra.mxu0 0
    %1166 = vmatprep.subr.bf16.mxu0 0
    %1167 = vmatpush1.bf16.msra.mxu0 0
    %1168 = vmatprep.subr.bf16.mxu0 0
    %1169 = vmatpush1.bf16.msra.mxu0 0
    %1170 = vmatprep.subr.bf16.mxu0 0
    %1171 = vmatpush1.bf16.msra.mxu0 0
    %1172 = vmatprep.subr.bf16.mxu0 0
    %1173 = vmatpush1.bf16.msra.mxu0 0
    %1174 = vmatprep.subr.bf16.mxu0 0
    %1175 = vmatpush1.bf16.msra.mxu0 0
    %1176 = vmatprep.subr.bf16.mxu0 0
    %1177 = vmatpush1.bf16.msra.mxu0 0
    %1178 = vmatprep.subr.bf16.mxu0 0
    %1179 = vmatpush1.bf16.msra.mxu0 0
    %1180 = vmatprep.subr.bf16.mxu0 0
    %1181 = vmatpush1.bf16.msra.mxu0 0
    %1182 = vmatprep.subr.bf16.mxu0 0
    %1183 = vmatpush1.bf16.msra.mxu0 0
    %1184 = vmatprep.subr.bf16.mxu0 0
    %1185 = vmatpush1.bf16.msra.mxu0 0
    %1186 = vmatprep.subr.bf16.mxu0 0
    %1187 = vmatpush1.bf16.msra.mxu0 0
    %1188 = vmatprep.subr.bf16.mxu0 0
    %1189 = vmatpush1.bf16.msra.mxu0 0
    %1190 = vmatprep.mubr.bf16.mxu0 0
    %1191 = vmatmul.mubr.bf16.gmra.mrb[0].mxu0 %v1156
    %v1192 = vpop.f32.mrb[0].mxu0
    %v1193 = vadd.f32 %v1138, %v1192
    %v1194 = vpop.f32.mrb[0].mxu0
    %v1195 = vpop.f32.mrb[0].mxu0
    %v1196 = vpop.f32.mrb[0].mxu0
    %1197 = vdwg.mxu0
    %v1198 = vlaneseq
    %v1199 = vshrl.u32 %v1198, 7
    %v1200 = vsub.s32 6, %v1199
    %v1201 = vrot.slane %v563, %v1200
    %v1202 = vadd.f32 %v1193, %v1201
    %vm1203 = vcmp.ge.f32.partialorder %v1202, 0.0
    %v1204 = vmul.f32 %v1202, 0.01
    %v1205 = vsel %vm1203, %v1202, %v1204
    %v1206 = vlaneseq
    %v1207 = vshrl.u32 %v1206, 7
    %v1208 = vsub.s32 7, %v1207
    %v1209 = vrot.slane %v563, %v1208
    %v1210 = vmul.f32 %v1205, %v1209
    %v1211 = vsel %vm646, %v1210, 0.0
    %1212 = vadd.xlane.f32.xlu0 %v1211
    %v1213 = vpop.xlane.xlu0 %1212
    %v1214 = vlaneseq
    %v1215 = vshrl.u32 %v1214, 7
    %v1216 = vsub.s32 0, %v1215
    %v1217 = vrot.slane %v564, %v1216
    %v1218 = vadd.f32 %v1213, %v1217
    %v1219 = vxor.u32 %v1218, 2147483648
    %v1220 = vmul.f32 %v1219, 1.442695
    %v1221 = vpow.pop %v1220
    %v1222 = vadd.f32 %v1221, 1.0
    %v1223 = vrcp.pop %v1222
    %v1224 = vmul.f32 1.0, %v1223
    %vm1225 = vcmask 7168
    %1226 = vst.msk [vmem:[%s4] sm:$0xff] %vm1225, %v1224
    // Predicated region
    $region22: #{tpu_custom_call.1} parent=1 // pred_check
      _
    $region23: #{tpu_custom_call.1} parent=1 // pred_check_branch
      %1228 = sbr.rel (0) target = $region25
    $region24: #{tpu_custom_call.1} parent=1 // pred_region
      _
    $region25: #{tpu_custom_call.1} parent=1 // pred_fallthru
      _
    // Predicated region
    $region26: #{tpu_custom_call.1} parent=1 // pred_check
      _
    $region27: #{tpu_custom_call.1} parent=1 // pred_check_branch
      %1230 = sbr.rel (0) target = $region29
    $region28: #{tpu_custom_call.1} parent=1 // pred_region
      _
    $region29: #{tpu_custom_call.1} parent=1 // pred_fallthru
      _
    %1231 = vsyncpa [#allocation3], 1

</llo_original>
